<compile_context>
chip_gen: v5e
topology: v5e:2x2
jax: 0.10.0
libtpu: 0.0.40
codegen_flags: <defaults>
</compile_context>

<pallas_src>
import functools
import math

import jax
import jax.numpy as jnp
from jax.experimental import pallas as pl
from jax.experimental.pallas import tpu as pltpu


def _round_up(x, m):
    return ((x + m - 1) // m) * m


def _tpu_vmem_capacity_bytes():
    """Physical VMEM per core; conservative fallback if the query fails."""
    try:
        return int(pltpu.get_tpu_info().vmem_capacity_bytes)
    except Exception:
        return 64 * 1024 * 1024  # v7x-sized (smallest current generation)


def _pick_tk(K, tile_k):
    """Pick tk: prefer an MXU-aligned divisor of K; otherwise an aligned tile
    whose ragged last block is masked inside the kernel (no HBM padding)."""
    if K <= tile_k:
        return K  # full-K block is exempt from the (8,128) divisibility rule
    for gran in (256, 128):
        t = (tile_k // gran) * gran
        while t >= gran:
            if K % t == 0:
                return t
            t -= gran
    return max(128, (tile_k // 128) * 128)  # ragged; kernel masks last block


def _default_tiles(operand_itemsize, vmem_cap):
    """Per-generation tile table (keyed on physical VMEM)."""
    if vmem_cap >= 96 * 1024 * 1024:
        # v5e / v6e: 128 MiB VMEM.
        return 2048, 1024, 512
    # v7x: 64 MiB VMEM per TensorCore -- keep double-buffered footprint small.
    if operand_itemsize <= 2:
        return 2048, 1024, 512       # ~22 MiB double-buffered (bf16)
    return 1024, 1024, 512           # ~20 MiB double-buffered (f32)


def _linear_kernel(x_ref, w_ref, o_ref, acc_ref, *, k_total, tk, compute_dtype):
    """One (tm, tn) output tile of x @ w.T, accumulating over the K grid axis.

    x_ref: (tm, tk) tile of the flattened input
    w_ref: (tn, tk) tile of the weight in its native (N, K) layout
    o_ref: (tm, tn) output tile
    acc_ref: (tm, tn) f32 accumulator scratch (resident across the K axis)
    """
    k_idx = pl.program_id(2)

    @pl.when(k_idx == 0)
    def _init():
        acc_ref[...] = jnp.zeros_like(acc_ref)

    x = x_ref[...]
    w = w_ref[...]

    # Static branch: only emitted when K is not a multiple of tk.  Zero both
    # operands beyond the valid K extent so garbage in the padded region of
    # the last block never reaches the accumulator.
    if k_total % tk != 0:
        valid = k_total - k_idx * tk
        kpos = jax.lax.broadcasted_iota(jnp.int32, (1, tk), 1)
        keep = kpos < valid
        x = jnp.where(keep, x, jnp.zeros_like(x))
        w = jnp.where(keep, w, jnp.zeros_like(w))

    if compute_dtype is not None and x.dtype != jnp.dtype(compute_dtype):
        x = x.astype(compute_dtype)
        w = w.astype(compute_dtype)

    # x @ w.T expressed as a dot_general contraction on the shared K axis so
    # the weight never needs a wrapper-side transpose.
    acc_ref[...] += jax.lax.dot_general(
        x, w,
        dimension_numbers=(((1,), (1,)), ((), ())),
        preferred_element_type=jnp.float32,
    )

    @pl.when(k_idx == pl.num_programs(2) - 1)
    def _store():
        o_ref[...] = acc_ref[...].astype(o_ref.dtype)


def qew_qetx_forward(x, w, *, tile_m=None, tile_n=None, tile_k=None,
                     compute_dtype=None):
    """Pallas implementation of QEW_QEtX_Scheme.forward: F.linear(x, w, None).

    x: (..., K), w: (N, K)  ->  (..., N)

    compute_dtype: optional MXU operand dtype (e.g. jnp.bfloat16); the
    accumulator stays f32.  None (default) keeps the input dtype, faithful to
    F.linear.
    """
    *lead, K = x.shape
    N, Kw = w.shape
    assert K == Kw, f"feature-dim mismatch: x has {K}, w has {Kw}"

    M = math.prod(lead) if lead else 1
    out_shape = (*lead, N)
    if M == 0 or N == 0 or K == 0:
        return jnp.zeros(out_shape, x.dtype)

    x2 = x.reshape(M, K)

    x_bytes = jnp.dtype(x.dtype).itemsize
    w_bytes = jnp.dtype(w.dtype).itemsize
    out_bytes = x_bytes

    vmem_cap = _tpu_vmem_capacity_bytes()
    op_itemsize = (jnp.dtype(compute_dtype).itemsize if compute_dtype is not None
                   else max(x_bytes, w_bytes))
    dm, dn, dk = _default_tiles(op_itemsize, vmem_cap)
    tile_m = dm if tile_m is None else tile_m
    tile_n = dn if tile_n is None else tile_n
    tile_k = dk if tile_k is None else tile_k

    # Clamp tiles to the array extents (full-dim blocks are exempt from the
    # (8, 128) divisibility rule, so tiny shapes stay legal).
    tm = min(tile_m, M)
    tn = min(tile_n, N)
    tk = _pick_tk(K, tile_k)

    # v7x has 2 TensorCores per chip and shards the "parallel" grid axes
    # across them; make sure those axes produce at least 2 blocks when the
    # problem allows it (harmless on single-TC v5e/v6e).
    if pl.cdiv(M, tm) * pl.cdiv(N, tn) < 2:
        if M >= 16:
            tm_split = max(8, _round_up(pl.cdiv(M, 2), 8))
            if tm_split < M:
                tm = tm_split
        elif N >= 256:
            tn_split = max(128, _round_up(pl.cdiv(N, 2), 128))
            if tn_split < N:
                tn = tn_split

    grid = (pl.cdiv(M, tm), pl.cdiv(N, tn), pl.cdiv(K, tk))
    n_m, n_n, _ = grid

    # VMEM budget: double-buffered input tiles + output tile + f32 accumulator,
    # with headroom, capped at 80% of physical capacity (64 MiB on v7x).
    vmem_est = (2 * (tm * tk * x_bytes + tn * tk * w_bytes)
                + 2 * tm * tn * out_bytes
                + tm * tn * 4)
    vmem_limit = int(min(0.8 * vmem_cap, max(32 * 1024 * 1024, 2 * vmem_est)))

    # Real streaming traffic: x is re-read once per N block, w once per M
    # block; flops use the true (unpadded) K.
    cost = pl.CostEstimate(
        flops=2 * M * N * K,
        transcendentals=0,
        bytes_accessed=(M * K * x_bytes * n_n
                        + N * K * w_bytes * n_m
                        + M * N * out_bytes),
    )

    kernel = functools.partial(_linear_kernel, k_total=K, tk=tk,
                               compute_dtype=compute_dtype)

    out = pl.pallas_call(
        kernel,
        out_shape=jax.ShapeDtypeStruct((M, N), x.dtype),
        grid_spec=pltpu.PrefetchScalarGridSpec(
            num_scalar_prefetch=0,
            grid=grid,
            in_specs=[
                pl.BlockSpec((tm, tk), lambda i, j, k: (i, k)),  # x tile
                pl.BlockSpec((tn, tk), lambda i, j, k: (j, k)),  # w tile (N,K)
            ],
            out_specs=pl.BlockSpec((tm, tn), lambda i, j, k: (i, j)),
            scratch_shapes=[pltpu.VMEM((tm, tn), jnp.float32)],
        ),
        compiler_params=pltpu.CompilerParams(
            dimension_semantics=("parallel", "parallel", "arbitrary"),
            vmem_limit_bytes=vmem_limit,
        ),
        cost_estimate=cost,
    )(x2, w)

    return out.reshape(out_shape)


# TODO(synk): the quantized custom backward (QEW_QEtXFn.backward with
# g_quantizer) is autograd machinery, not part of the forward semantics, and
# is intentionally not implemented here.


if __name__ == "__main__":
    key = jax.random.PRNGKey(0)
    kx, kw, kx2, kw2 = jax.random.split(key, 4)

    # --- Small test at the shapes implied by the module (Linear over a batch
    # of sequences): batch=2, seq=8, in_features=32, out_features=64. ---
    B, S, K, N = 2, 8, 32, 64
    x = jax.random.normal(kx, (B, S, K), dtype=jnp.float32)
    w = jax.random.normal(kw, (N, K), dtype=jnp.float32) * (1.0 / math.sqrt(K))

    y = jax.block_until_ready(qew_qetx_forward(x, w))
    y_ref = jnp.einsum("bsk,nk->bsn", x, w,
                       precision=jax.lax.Precision.HIGHEST)
    assert y.shape == (B, S, N)
    assert jnp.allclose(y, y_ref, atol=1e-4, rtol=1e-4), "small-shape mismatch"

    # --- Medium test exercising multi-block parallel grid + full-K block. ---
    B2, S2, K2, N2 = 4, 256, 384, 512
    x_big = jax.random.normal(kx2, (B2, S2, K2), dtype=jnp.float32)
    w_big = jax.random.normal(kw2, (N2, K2), dtype=jnp.float32) * (
        1.0 / math.sqrt(K2))

    y_big = jax.block_until_ready(qew_qetx_forward(x_big, w_big))
    y_big_ref = jnp.einsum("bsk,nk->bsn", x_big, w_big,
                           precision=jax.lax.Precision.HIGHEST)
    assert y_big.shape == (B2, S2, N2)
    assert jnp.allclose(y_big, y_big_ref, atol=2e-3, rtol=2e-3), \
        "medium-shape mismatch"

    # --- bf16-operand fast path (f32 accumulator), loose tolerance. ---
    y_bf16 = jax.block_until_ready(
        qew_qetx_forward(x_big, w_big, compute_dtype=jnp.bfloat16))
    assert y_bf16.shape == (B2, S2, N2)
    assert jnp.allclose(y_bf16, y_big_ref, atol=1e-1, rtol=1e-1), \
        "bf16-compute mismatch"

    print("KERNEL_OK")
</pallas_src>

<mosaic_0001>
module attributes {stable_mosaic.version = 11 : i64} {
  func.func @_linear_kernel(%arg0: i32, %arg1: i32, %arg2: i32, %arg3: memref<8x32xf32, #tpu.memory_space<vmem>>, %arg4: memref<64x32xf32, #tpu.memory_space<vmem>>, %arg5: memref<8x64xf32, #tpu.memory_space<vmem>>, %arg6: memref<8x64xf32, #tpu.memory_space<vmem>>) attributes {dimension_semantics = [#tpu.dimension_semantics<parallel>, #tpu.dimension_semantics<parallel>, #tpu.dimension_semantics<arbitrary>], iteration_bounds = array<i64: 2, 1, 1>, scalar_prefetch = 0 : i64, scratch_operands = 1 : i64, tpu.core_type = #tpu.core_type<tc>, window_params = [{transform_indices = @transform_0, window_bounds = array<i64: 8, 32>}, {transform_indices = @transform_1, window_bounds = array<i64: 64, 32>}, {transform_indices = @transform_2, window_bounds = array<i64: 8, 64>}]} {
    %c0_i32 = arith.constant 0 : i32
    %0 = arith.cmpi eq, %arg2, %c0_i32 : i32
    %1 = arith.extui %0 : i1 to i32
    %c0_i32_0 = arith.constant 0 : i32
    %2 = arith.cmpi ne, %1, %c0_i32_0 : i32
    scf.if %2 {
      %cst_10 = arith.constant 0.000000e+00 : f32
      %12 = vector.broadcast %cst_10 : f32 to vector<8x64xf32>
      %c0_11 = arith.constant 0 : index
      %c0_12 = arith.constant 0 : index
      %13 = vector.load %arg6[%c0_11, %c0_12] : memref<8x64xf32, #tpu.memory_space<vmem>>, vector<8x64xf32>
      tpu.vector_store %arg6[%c0_11, %c0_12], %12 {strides = array<i32>} : memref<8x64xf32, #tpu.memory_space<vmem>>, vector<8x64xf32>,
    } else {
    }
    %c0 = arith.constant 0 : index
    %c0_1 = arith.constant 0 : index
    %3 = vector.load %arg3[%c0, %c0_1] : memref<8x32xf32, #tpu.memory_space<vmem>>, vector<8x32xf32>
    %c0_2 = arith.constant 0 : index
    %c0_3 = arith.constant 0 : index
    %4 = vector.load %arg4[%c0_2, %c0_3] : memref<64x32xf32, #tpu.memory_space<vmem>>, vector<64x32xf32>
    %c0_4 = arith.constant 0 : index
    %c0_5 = arith.constant 0 : index
    %5 = vector.load %arg6[%c0_4, %c0_5] : memref<8x64xf32, #tpu.memory_space<vmem>>, vector<8x64xf32>
    %cst = arith.constant dense<0.000000e+00> : vector<8x64xf32>
    %6 = tpu.matmul %3, %4, %cst {dimension_numbers = #tpu.dot_dimension_numbers<[1], [1], [0], [0], [0, 0, 1, 0], [], []>} : vector<8x32xf32>, vector<64x32xf32>, vector<8x64xf32> -> vector<8x64xf32>
    %7 = arith.addf %5, %6 : vector<8x64xf32>
    %c0_6 = arith.constant 0 : index
    %c0_7 = arith.constant 0 : index
    %8 = vector.load %arg6[%c0_6, %c0_7] : memref<8x64xf32, #tpu.memory_space<vmem>>, vector<8x64xf32>
    tpu.vector_store %arg6[%c0_6, %c0_7], %7 {strides = array<i32>} : memref<8x64xf32, #tpu.memory_space<vmem>>, vector<8x64xf32>,
    %c0_i32_8 = arith.constant 0 : i32
    %9 = arith.cmpi eq, %arg2, %c0_i32_8 : i32
    %10 = arith.extui %9 : i1 to i32
    %c0_i32_9 = arith.constant 0 : i32
    %11 = arith.cmpi ne, %10, %c0_i32_9 : i32
    scf.if %11 {
      %c0_10 = arith.constant 0 : index
      %c0_11 = arith.constant 0 : index
      %12 = vector.load %arg6[%c0_10, %c0_11] : memref<8x64xf32, #tpu.memory_space<vmem>>, vector<8x64xf32>
      %c0_12 = arith.constant 0 : index
      %c0_13 = arith.constant 0 : index
      %13 = vector.load %arg5[%c0_12, %c0_13] : memref<8x64xf32, #tpu.memory_space<vmem>>, vector<8x64xf32>
      tpu.vector_store %arg5[%c0_12, %c0_13], %12 {strides = array<i32>} : memref<8x64xf32, #tpu.memory_space<vmem>>, vector<8x64xf32>,
    } else {
    }
    return
  }
  func.func @transform_0(%arg0: i32, %arg1: i32, %arg2: i32) -> (i32, i32) {
    %c0_i32 = arith.constant 0 : i32
    return %arg0, %arg2 : i32, i32
  }
  func.func @transform_1(%arg0: i32, %arg1: i32, %arg2: i32) -> (i32, i32) {
    %c0_i32 = arith.constant 0 : i32
    return %arg1, %arg2 : i32, i32
  }
  func.func @transform_2(%arg0: i32, %arg1: i32, %arg2: i32) -> (i32, i32) {
    %c0_i32 = arith.constant 0 : i32
    return %arg0, %arg1 : i32, i32
  }
}

</mosaic_0001>

<llo_original>
// kernel: tpu_custom_call.1
$region0: #{tpu_custom_call.1}
  #allocation0 [shape = 'u32[]', space=smem, size = 0x4, offset = 0x4, fixed_abs, tag = 'smem constant byte address 0x4 - core index']
  #allocation1 [shape = 'u32[72,128]{1,0:T(1,128)}', space=vmem, size = 0x9000, scoped, tag = 'internal scratch']
  #allocation2 [shape = 'f32[8,64]{1,0:T(8,128)}', space=vmem, size = 0x1000, scoped, tag = 'scratch operand']
  %s0 = inlined_call_operand.vmem [shape: f32[16,32], index: 0, kind: input, shape index: {}]
  %s1 = inlined_call_operand.vmem [shape: f32[64,32], index: 1, kind: input, shape index: {}]
  %s2 = inlined_call_operand.hbm [shape: f32[16,64], index: 2, kind: output, shape index: {}]
  %s3 = sld [smem:[#allocation0]]
  $region49: #{tpu_custom_call.1} parent=0
    _
  %s5 = ssub.s32 1, %s3
  %s6 = scalar_select 0, %s5, %s3
  $region1: #{tpu_custom_call.1} parent=0
    #allocation3 [shape = 'u8[8192]{0}', space=vmem, size = 0x2000, scoped, tag = 'output window, operand 0']
    #allocation4 [shape = 's32[2]{0}', space=sflag, size = 0x8, scoped, tag = 'scoped memory for tpu_custom_call.1']
    %7 = vsyncpa [#allocation4], 0
    %s8 = scalar_lea.sflag [#allocation4], 1
    %9 = vsyncpa %s8, 0
    loop: start=0, step=1, limit=4
    $region2: #{tpu_custom_call.1} parent=1 // loop_pre_header
      _
    $region3: #{tpu_custom_call.1} parent=1 // loop_header
      %s11 = sphi 0, %s15
      %p12 = scmp.ge.s32.totalorder %s11, 4
      %s18 = sphi 0, %s37
      %s19 = sphi 0, %s33
      %s20 = sphi 0, %s29
      %s21 = sphi 0, %s18
      %s22 = sphi 0, %s19
      %s23 = sphi 0, %s20
      %s24 = sphi 0, %s21
      %s25 = sphi 0, %s22
      %s26 = sphi 0, %s23
      %s42 = sphi 0, %s44
      %s45 = sphi 0, %s42
      %s46 = sphi 0, %s45
      %s62 = sphi 0, %s46
      %s70 = sphi 0, %s72
      %s73 = sphi 0, %s70
      %s74 = sphi 0, %s73
      %s90 = sphi 0, %s74
      %s98 = sphi 0, %s100
      %s101 = sphi 0, %s98
      %s102 = sphi 0, %s101
      %s118 = sphi 0, %s102
    $region4: #{tpu_custom_call.1} parent=1 // loop_header_branch
      %14 = sbr.rel (%p12) target = $region8
    $region5: #{tpu_custom_call.1} parent=1 // loop_body
      %s16 = ssub.s32 %s11, 1
      %s17 = ssub.s32 %s11, 2
      %s27 = sadd.s32 1, %s20
      %p28 = scmp.ge.s32.totalorder %s27, 1
      %s29 = scalar_select %p28, 0, %s27
      %s30 = sadd.s32 1, %s19
      %s31 = scalar_select %p28, %s30, %s19
      %p32 = scmp.ge.s32.totalorder %s31, 1
      %s33 = scalar_select %p32, 0, %s31
      %s34 = sadd.s32 1, %s18
      %s35 = scalar_select %p32, %s34, %s18
      %p36 = scmp.ge.s32.totalorder %s35, 2
      %s37 = scalar_select %p36, 0, %s35
      %s38 = ssub.s32 %s18, %s37
      %s39 = ssub.s32 %s20, %s29
      %s40 = sor.u32 %s38, %s39
      %p41 = scmp.eq.s32.totalorder %s40, 0
      %s43 = sadd.s32 %s42, 1
      %s44 = scalar_select %p41, %s42, %s43
      %p47 = pneg %p41
      %p48 = scmp.eq.s32.totalorder %s11, 1
      %p49 = por %p47, %p48
      %p50 = scmp.ne.s32.totalorder %s42, %s45
      %p51 = scmp.eq.s32.totalorder %s11, 0
      %p52 = por %p50, %p51
      %p53 = scmp.ne.s32.totalorder %s42, %s45
      %p54 = scmp.eq.s32.totalorder %s16, 1
      %p55 = por %p53, %p54
      %p56 = scmp.ne.s32.totalorder %s45, %s46
      %p57 = scmp.eq.s32.totalorder %s16, 0
      %p58 = por %p56, %p57
      %p59 = scmp.ne.s32.totalorder %s45, %s46
      %p60 = scmp.eq.s32.totalorder %s17, 1
      %p61 = por %p59, %p60
      %p63 = scmp.ne.s32.totalorder %s46, %s62
      %p64 = scmp.eq.s32.totalorder %s17, 0
      %p65 = por %p63, %p64
      %s66 = ssub.s32 %s19, %s33
      %s67 = ssub.s32 %s20, %s29
      %s68 = sor.u32 %s66, %s67
      %p69 = scmp.eq.s32.totalorder %s68, 0
      %s71 = sadd.s32 %s70, 1
      %s72 = scalar_select %p69, %s70, %s71
      %p75 = pneg %p69
      %p76 = scmp.eq.s32.totalorder %s11, 1
      %p77 = por %p75, %p76
      %p78 = scmp.ne.s32.totalorder %s70, %s73
      %p79 = scmp.eq.s32.totalorder %s11, 0
      %p80 = por %p78, %p79
      %p81 = scmp.ne.s32.totalorder %s70, %s73
      %p82 = scmp.eq.s32.totalorder %s16, 1
      %p83 = por %p81, %p82
      %p84 = scmp.ne.s32.totalorder %s73, %s74
      %p85 = scmp.eq.s32.totalorder %s16, 0
      %p86 = por %p84, %p85
      %p87 = scmp.ne.s32.totalorder %s73, %s74
      %p88 = scmp.eq.s32.totalorder %s17, 1
      %p89 = por %p87, %p88
      %p91 = scmp.ne.s32.totalorder %s74, %s90
      %p92 = scmp.eq.s32.totalorder %s17, 0
      %p93 = por %p91, %p92
      %s94 = ssub.s32 %s18, %s37
      %s95 = ssub.s32 %s19, %s33
      %s96 = sor.u32 %s94, %s95
      %p97 = scmp.eq.s32.totalorder %s96, 0
      %s99 = sadd.s32 %s98, 1
      %s100 = scalar_select %p97, %s98, %s99
      %p103 = pneg %p97
      %p104 = scmp.eq.s32.totalorder %s11, 1
      %p105 = por %p103, %p104
      %p106 = scmp.ne.s32.totalorder %s98, %s101
      %p107 = scmp.eq.s32.totalorder %s11, 0
      %p108 = por %p106, %p107
      %p109 = scmp.ne.s32.totalorder %s98, %s101
      %p110 = scmp.eq.s32.totalorder %s16, 1
      %p111 = por %p109, %p110
      %p112 = scmp.ne.s32.totalorder %s101, %s102
      %p113 = scmp.eq.s32.totalorder %s16, 0
      %p114 = por %p112, %p113
      %p115 = scmp.ne.s32.totalorder %s101, %s102
      %p116 = scmp.eq.s32.totalorder %s17, 1
      %p117 = por %p115, %p116
      %p119 = scmp.ne.s32.totalorder %s102, %s118
      %p120 = scmp.eq.s32.totalorder %s17, 0
      %p121 = por %p119, %p120
      %p122 = scmp.le.s32.totalorder 1, %s11
      %p123 = scmp.lt.s32.totalorder %s11, 3
      %p124 = pnand %p122, %p123
      %p125 = pneg %p124
      // Predicated region
      $region9: #{tpu_custom_call.1} parent=5 // pred_check
        _
      $region10: #{tpu_custom_call.1} parent=5 // pred_check_branch
        %127 = sbr.rel (%p124) target = $region12
      $region11: #{tpu_custom_call.1} parent=5 // pred_region
        %s128 = ssub.s32 %s11, 1
        // Predicated region
        $region13: #{tpu_custom_call.1} parent=11 // pred_check
          %p129 = pneg %p86
        $region14: #{tpu_custom_call.1} parent=11 // pred_check_branch
          %131 = sbr.rel (%p129) target = $region16
        $region15: #{tpu_custom_call.1} parent=11 // pred_region
          %s132 = smul.u32 8, %s22
          %p133 = scmp.lt.s32.totalorder %s132, 7
          %s134 = scalar_select %p133, %s132, 7
          %p135 = scmp.lt.s32.totalorder %s23, 0
          %s136 = scalar_select %p135, %s23, 0
          %s137 = sadd.s32 %s136, %s134
          %s138 = smul.addr %s137, 8
          %s139 = scalar_lea.vmem %s1, %s138
          %s140 = smul.u32 8, %s22
        $region16: #{tpu_custom_call.1} parent=11 // pred_fallthru
          _
      $region12: #{tpu_custom_call.1} parent=5 // pred_fallthru
        _
      %p141 = scmp.lt.s32.totalorder %s11, 2
      // Predicated region
      $region17: #{tpu_custom_call.1} parent=5 // pred_check
        %p142 = pneg %p141
      $region18: #{tpu_custom_call.1} parent=5 // pred_check_branch
        %144 = sbr.rel (%p142) target = $region20
      $region19: #{tpu_custom_call.1} parent=5 // pred_region
        // Predicated region
        $region21: #{tpu_custom_call.1} parent=19 // pred_check
          %p145 = pneg %p52
        $region22: #{tpu_custom_call.1} parent=19 // pred_check_branch
          %147 = sbr.rel (%p145) target = $region24
        $region23: #{tpu_custom_call.1} parent=19 // pred_region
          %p148 = scmp.lt.s32.totalorder %s18, 1
          %s149 = scalar_select %p148, %s18, 1
          %p150 = scmp.lt.s32.totalorder %s20, 0
          %s151 = scalar_select %p150, %s20, 0
          %s152 = sadd.s32 %s151, %s149
          %s153 = smul.addr %s152, 8
          %s154 = scalar_lea.vmem %s0, %s153
        $region24: #{tpu_custom_call.1} parent=19 // pred_fallthru
          _
      $region20: #{tpu_custom_call.1} parent=5 // pred_fallthru
        _
      %p155 = scmp.le.s32.totalorder 1, %s11
      %p156 = scmp.lt.s32.totalorder %s11, 3
      %p157 = pnand %p155, %p156
      %p158 = pneg %p157
      // Predicated region
      $region25: #{tpu_custom_call.1} parent=5 // pred_check
        _
      $region26: #{tpu_custom_call.1} parent=5 // pred_check_branch
        %160 = sbr.rel (%p157) target = $region28
      $region27: #{tpu_custom_call.1} parent=5 // pred_region
        %s161 = ssub.s32 %s11, 1
        %p162 = scmp.lt.s32.totalorder %s21, 1
        %s163 = scalar_select %p162, %s21, 1
        %p164 = scmp.lt.s32.totalorder %s23, 0
        %s165 = scalar_select %p164, %s23, 0
        %s166 = sadd.s32 %s165, %s163
        %s167 = smul.addr %s166, 8
        %s168 = scalar_lea.vmem %s0, %s167
        %p169 = pneg %p58
        %p170 = pneg %p55
        %s171 = smul.u32 8, %s22
        %p172 = scmp.lt.s32.totalorder %s171, 7
        %s173 = scalar_select %p172, %s171, 7
        %p174 = scmp.lt.s32.totalorder %s23, 0
        %s175 = scalar_select %p174, %s23, 0
        %s176 = sadd.s32 %s175, %s173
        %s177 = smul.addr %s176, 8
        %s178 = scalar_lea.vmem %s1, %s177
        %p179 = pneg %p86
        %p180 = pneg %p83
        %p181 = pneg %p114
        %p182 = pneg %p111
        %s183 = sand.u32 %s101, 1
        %s184 = scalar_lea.sflag [#allocation4], %s183
        %s185 = sand.u32 %s101, 1
        %s186 = smul.addr %s185, 8
        %s187 = scalar_lea.vmem [#allocation3], %s186
        %p188 = scmp.lt.s32.totalorder %s21, 1
        %s189 = scalar_select %p188, %s21, 1
        %p190 = scmp.lt.s32.totalorder %s23, 0
        %s191 = scalar_select %p190, %s23, 0
        %s192 = sadd.s32 %s191, %s189
        %s193 = smul.addr %s192, 8
        %s194 = scalar_lea.vmem %s0, %s193
        %s195 = smul.u32 8, %s22
        %p196 = scmp.lt.s32.totalorder %s195, 7
        %s197 = scalar_select %p196, %s195, 7
        %p198 = scmp.lt.s32.totalorder %s23, 0
        %s199 = scalar_select %p198, %s23, 0
        %s200 = sadd.s32 %s199, %s197
        %s201 = smul.addr %s200, 8
        %s202 = scalar_lea.vmem %s1, %s201
        %s203 = smul.u32 8, %s22
        %p204 = scmp.eq.s32.totalorder %s23, 0
        // Predicated region
        $region29: #{tpu_custom_call.1} parent=27 // pred_check
          %p205 = pneg %p204
        $region30: #{tpu_custom_call.1} parent=27 // pred_check_branch
          %207 = sbr.rel (%p205) target = $region32
        $region31: #{tpu_custom_call.1} parent=27 // pred_region
          %vm208 = vcmask 523264
          %209 = vst.msk [vmem:[#allocation2] sm:$0xff] %vm208, 0.0
        $region32: #{tpu_custom_call.1} parent=27 // pred_fallthru
          _
        %v210 = vld [vmem:[%s194] sm:$0xff]
        %v211 = vld [vmem:[%s202] sm:$0xff]
        %v212 = vld [vmem:[%s202 + $0x8] sm:$0xff]
        %v213 = vld [vmem:[%s202 + $0x10] sm:$0xff]
        %v214 = vld [vmem:[%s202 + $0x18] sm:$0xff]
        %v215 = vld [vmem:[%s202 + $0x20] sm:$0xff]
        %v216 = vld [vmem:[%s202 + $0x28] sm:$0xff]
        %v217 = vld [vmem:[%s202 + $0x30] sm:$0xff]
        %v218 = vld [vmem:[%s202 + $0x38] sm:$0xff]
        %v219 = vld [vmem:[#allocation2] sm:$0xff]
        %vm220 = vcmask 261120
        %v222 = vsel %vm220, %v210, 0
        %v225 = vsel %vm220, %v211, 0
        %v228 = vsel %vm220, %v212, 0
        %v231 = vsel %vm220, %v213, 0
        %v234 = vsel %vm220, %v214, 0
        %v237 = vsel %vm220, %v215, 0
        %v240 = vsel %vm220, %v216, 0
        %v243 = vsel %vm220, %v217, 0
        %v246 = vsel %vm220, %v218, 0
        %248 = vmatpush.xpose.msra.mxu0 0.0
        %249 = vmatpush.xpose.msra.mxu0 0.0
        %250 = vmatpush.xpose.msra.mxu0 0.0
        %251 = vmatpush.xpose.msra.mxu0 0.0
        %252 = vmatpush.xpose.msra.mxu0 0.0
        %253 = vmatpush.xpose.msra.mxu0 0.0
        %254 = vmatpush.xpose.msra.mxu0 0.0
        %255 = vmatpush.xpose.msra.mxu0 0.0
        %256 = vmatpush.xpose.msra.mxu0 %v246
        %257 = vmatpush.xpose.msra.mxu0 %v243
        %258 = vmatpush.xpose.msra.mxu0 %v240
        %259 = vmatpush.xpose.msra.mxu0 %v237
        %260 = vmatpush.xpose.msra.mxu0 %v234
        %261 = vmatpush.xpose.msra.mxu0 %v231
        %262 = vmatpush.xpose.msra.mxu0 %v228
        %263 = vmatpush.xpose.msra.mxu0 %v225
        %264 = vmatmul.f32.gmra.mxu0 %v222
        %v265 = vpop.f32.mrf.mxu0
        %v266 = vadd.f32 0.0, %v265
        %267 = vdwg.mxu0
        %v268 = vadd.f32 %v219, %v266
        %vm269 = vcmask 523264
        %270 = vst.msk [vmem:[#allocation2] sm:$0xff] %vm269, %v268
        // Predicated region
        $region33: #{tpu_custom_call.1} parent=27 // pred_check
          %p271 = pneg %p204
        $region34: #{tpu_custom_call.1} parent=27 // pred_check_branch
          %273 = sbr.rel (%p271) target = $region36
        $region35: #{tpu_custom_call.1} parent=27 // pred_region
          %v274 = vld [vmem:[#allocation2] sm:$0xff]
          %275 = vst.msk [vmem:[%s187] sm:$0xff] %vm269, %v274
        $region36: #{tpu_custom_call.1} parent=27 // pred_fallthru
          _
        %s276 = sand.u32 %s101, 1
        %s277 = scalar_lea.sflag [#allocation4], %s276
        %s278 = sand.u32 %s101, 1
        %s279 = smul.addr %s278, 8
        %s280 = scalar_lea.vmem [#allocation3], %s279
        // Predicated region
        $region37: #{tpu_custom_call.1} parent=27 // pred_check
          %p281 = pneg %p111
        $region38: #{tpu_custom_call.1} parent=27 // pred_check_branch
          %283 = sbr.rel (%p281) target = $region40
        $region39: #{tpu_custom_call.1} parent=27 // pred_region
          %285 = vsyncadd %s277, 0
          %s286 = sadd.s32 %s22, %s21
          %s287 = smul.addr %s286, 8
          %s288 = scalar_lea.hbm %s2, %s287
          %s290 = sshll.u32 %s280, 4
          %s291 = int_to_ptr.vmem [resolvable:$true] %s290
          %s292 = sshll.u32 %s288, 4
          %s293 = int_to_ptr.hbm [resolvable:$true] %s292
          %295 = dma.vmem_to_hbm [thread:$0]  %s291, 128, %s293, %s277
        $region40: #{tpu_custom_call.1} parent=27 // pred_fallthru
          _
      $region28: #{tpu_custom_call.1} parent=5 // pred_fallthru
        _
      %p296 = scmp.le.s32.totalorder 2, %s11
      // Predicated region
      $region41: #{tpu_custom_call.1} parent=5 // pred_check
        %p297 = pneg %p296
      $region42: #{tpu_custom_call.1} parent=5 // pred_check_branch
        %299 = sbr.rel (%p297) target = $region44
      $region43: #{tpu_custom_call.1} parent=5 // pred_region
        %s300 = ssub.s32 %s11, 2
        // Predicated region
        $region45: #{tpu_custom_call.1} parent=43 // pred_check
          %p301 = pneg %p117
        $region46: #{tpu_custom_call.1} parent=43 // pred_check_branch
          %303 = sbr.rel (%p301) target = $region48
        $region47: #{tpu_custom_call.1} parent=43 // pred_region
          %s304 = sand.u32 %s102, 1
          %s305 = scalar_lea.sflag [#allocation4], %s304
          %s306 = sand.u32 %s102, 1
          %s307 = smul.addr %s306, 8
          %s308 = scalar_lea.vmem [#allocation3], %s307
          %310 = dma.done %s305, 128
        $region48: #{tpu_custom_call.1} parent=43 // pred_fallthru
          _
      $region44: #{tpu_custom_call.1} parent=5 // pred_fallthru
        _
    $region6: #{tpu_custom_call.1} parent=1 // loop_footer
      %s15 = sadd.s32 1, %s11
    $region7: #{tpu_custom_call.1} parent=1 // loop_footer_branch
      %10 = sbr.rel target = $region3
    $region8: #{tpu_custom_call.1} parent=1 // loop_exit
      _
    %311 = vsyncpa [#allocation4], 1
    %s312 = scalar_lea.sflag [#allocation4], 1
    %313 = vsyncpa %s312, 1

</llo_original>
